<compile_context>
chip_gen: v5e
topology: v5e:2x2
jax: 0.10.0
libtpu: 0.0.40
codegen_flags: <defaults>
</compile_context>

<pallas_src>
import functools

import jax
import jax.numpy as jnp
from jax.experimental import pallas as pl
from jax.experimental.pallas import tpu as pltpu


# ----------------------------------------------------------------------------
# Fused stem kernel (one TR-row tile of tokens per grid step)
# ----------------------------------------------------------------------------
def _stem_kernel(p_ref, w1_ref, b1_ref, w2_ref, b2_ref, w3_ref, b3_ref,
                 o_ref, sbuf_ref, *, row_tile, wo):
    t = pl.program_id(1)
    n = row_tile * wo                         # tokens per tile

    # Scratch layout (sublane axis):
    #   row 0            : permanent zero row (top/left padding)
    #   rows [1, wo+1)   : carried S row of the previous tile (zero above image)
    #   rows [wo+1, wo+1+n): S rows of the current tile
    @pl.when(t == 0)
    def _():
        sbuf_ref[...] = jnp.zeros_like(sbuf_ref)

    # ---- stage 1: conv1 + BN1 + ReLU for the whole tile (one MXU matmul) -------
    p = p_ref[0]                                            # (n, 108) bf16
    s = jnp.dot(p, w1_ref[...], preferred_element_type=jnp.float32) + b1_ref[...]
    s = jnp.maximum(s, 0.0).astype(jnp.bfloat16)            # (n, 4*C1) parity-packed

    sbuf_ref[pl.ds(wo + 1, n), :] = s

    # Shifted views of S: previous token row / previous token column.
    s_prev   = sbuf_ref[pl.ds(1, n), :]                     # S[row-1, col]
    s_prev_l = sbuf_ref[pl.ds(0, n), :]                     # S[row-1, col-1] (needs mask)
    s_cur_l  = sbuf_ref[pl.ds(wo, n), :]                    # S[row,   col-1] (needs mask)

    col = jax.lax.broadcasted_iota(jnp.int32, (n, 1), 0)
    not_col0 = (col % wo) != 0                              # zero the left-padding column
    zero = jnp.zeros_like(s)
    s_prev_l = jnp.where(not_col0, s_prev_l, zero)
    s_cur_l = jnp.where(not_col0, s_cur_l, zero)

    # Carry: last token row of this tile becomes next tile's "previous row".
    sbuf_ref[pl.ds(1, wo), :] = s[n - wo:, :]

    # ---- stage 2: 3x3/s2 conv over y1 == 2x2/s1 conv over S (4 taps) + BN2+ReLU --
    acc = jnp.dot(s_prev_l, w2_ref[0], preferred_element_type=jnp.float32)
    acc = acc + jnp.dot(s_prev, w2_ref[1], preferred_element_type=jnp.float32)
    acc = acc + jnp.dot(s_cur_l, w2_ref[2], preferred_element_type=jnp.float32)
    acc = acc + jnp.dot(s, w2_ref[3], preferred_element_type=jnp.float32)
    h = jnp.maximum(acc + b2_ref[...], 0.0)                 # (n, C2) f32

    # ---- stage 3: 1x1 conv + bias -> final tokens --------------------------------
    out = jnp.dot(h.astype(jnp.bfloat16), w3_ref[...],
                  preferred_element_type=jnp.float32) + b3_ref[...]
    o_ref[0, :, :] = out


# ----------------------------------------------------------------------------
# Host-side helpers
# ----------------------------------------------------------------------------
def fold_bn(gamma, beta, mean, var, eps=1e-5):
    scale = gamma / jnp.sqrt(var + eps)
    bias = beta - mean * scale
    return scale, bias


def _pick_row_tile(h_out, target=8):
    for tr in range(min(target, h_out), 0, -1):
        if h_out % tr == 0:
            return tr
    return 1


def conv_stem_forward(x_nchw, params, embed_dim, *, row_tile_target=8):
    B, C, H, W = x_nchw.shape
    assert C == 3, "ConvStem hard-codes 3 input channels"
    # PyTorch's Conv2d(k=3,s=2,p=1) gives ceil(H/2); the module asserts H==img_size
    # with patch_size=4, so H % 4 == 0 covers its intended use.
    # TODO(synk): generalize the JAX-side repack for H or W not divisible by 4.
    assert H % 4 == 0 and W % 4 == 0
    D = embed_dim
    assert D % 8 == 0
    c1, c2 = D // 8, D // 4
    h_s1, w_s1 = H // 2, W // 2          # after stage 1
    h_out, w_out = H // 4, W // 4        # token grid
    tr = _pick_row_tile(h_out, row_tile_target)
    n_tok = tr * w_out
    f32 = jnp.float32

    # ---- prep #1: compact 27-tap repack of the raw input (bf16, ~input-sized) ----
    x = jnp.transpose(x_nchw, (0, 2, 3, 1)).astype(f32)        # NHWC
    xp = jnp.pad(x, ((0, 0), (1, 1), (1, 1), (0, 0)))
    taps = []
    for ky in range(3):
        for kx in range(3):
            taps.append(xp[:, ky:ky + 2 * h_s1:2, kx:kx + 2 * w_s1:2, :])
    p1 = jnp.stack(taps, axis=3)                               # (B, h1, w1, 9, 3)
    p1 = p1.reshape(B, h_out, 2, w_out, 2, 27)
    p1 = p1.transpose(0, 1, 3, 2, 4, 5)                        # (B, h2, w2, rp, cp, 27)
    p1 = p1.reshape(B, h_out * w_out, 4 * 27).astype(jnp.bfloat16)

    # ---- prep #2: weights with BN scales folded in --------------------------------
    s1, b1 = fold_bn(params["bn1_g"], params["bn1_b"], params["bn1_m"], params["bn1_v"])
    s2, b2 = fold_bn(params["bn2_g"], params["bn2_b"], params["bn2_m"], params["bn2_v"])

    # stage 1: (27, C1) scaled by BN1, replicated block-diagonally over the 4 parities
    w1m = jnp.transpose(params["conv1_w"], (2, 3, 1, 0)).reshape(27, c1) * s1[None, :]
    w1_blk = jnp.kron(jnp.eye(4, dtype=f32), w1m).astype(jnp.bfloat16)      # (108, 4*c1)
    b1_row = jnp.tile(b1, 4).reshape(1, 4 * c1).astype(f32)

    # stage 2: exact 2x2 conv weights over the parity-packed S (BN2 scale folded)
    w2m = jnp.transpose(params["conv2_w"], (2, 3, 1, 0)) * s2[None, None, None, :]  # (3,3,c1,c2)
    what = jnp.zeros((2, 2, 4, c1, c2), f32)
    what = what.at[0, 0, 3].set(w2m[0, 0])
    what = what.at[0, 1, 2].set(w2m[0, 1]).at[0, 1, 3].set(w2m[0, 2])
    what = what.at[1, 0, 1].set(w2m[1, 0]).at[1, 0, 3].set(w2m[2, 0])
    what = (what.at[1, 1, 0].set(w2m[1, 1]).at[1, 1, 1].set(w2m[1, 2])
                .at[1, 1, 2].set(w2m[2, 1]).at[1, 1, 3].set(w2m[2, 2]))
    w2_hat = what.reshape(4, 4 * c1, c2).astype(jnp.bfloat16)
    b2_row = b2.reshape(1, c2).astype(f32)

    # stage 3: 1x1 conv
    w3m = jnp.transpose(params["conv3_w"][:, :, 0, 0], (1, 0)).astype(jnp.bfloat16)  # (c2, D)
    b3_row = params["conv3_b"].reshape(1, D).astype(f32)

    kernel = functools.partial(_stem_kernel, row_tile=tr, wo=w_out)

    out = pl.pallas_call(
        kernel,
        out_shape=jax.ShapeDtypeStruct((B, h_out * w_out, D), f32),
        grid=(B, h_out // tr),
        in_specs=[
            pl.BlockSpec((1, n_tok, 4 * 27), lambda b, t: (b, t, 0)),
            pl.BlockSpec((4 * 27, 4 * c1), lambda b, t: (0, 0)),
            pl.BlockSpec((1, 4 * c1), lambda b, t: (0, 0)),
            pl.BlockSpec((4, 4 * c1, c2), lambda b, t: (0, 0, 0)),
            pl.BlockSpec((1, c2), lambda b, t: (0, 0)),
            pl.BlockSpec((c2, D), lambda b, t: (0, 0)),
            pl.BlockSpec((1, D), lambda b, t: (0, 0)),
        ],
        out_specs=pl.BlockSpec((1, n_tok, D), lambda b, t: (b, t, 0)),
        scratch_shapes=[pltpu.VMEM(((tr + 1) * w_out + 1, 4 * c1), jnp.bfloat16)],
        compiler_params=pltpu.CompilerParams(
            dimension_semantics=("parallel", "arbitrary"),
            vmem_limit_bytes=32 * 1024 * 1024),
    )(p1, w1_blk, b1_row, w2_hat, b2_row, w3m, b3_row)
    return out


# ----------------------------------------------------------------------------
# Pure-JAX f32 reference (mirrors PyTorch exactly) for sanity checking
# ----------------------------------------------------------------------------
def _ref_conv(x, w, stride, pad):
    return jax.lax.conv_general_dilated(
        x, w, window_strides=(stride, stride),
        padding=((pad, pad), (pad, pad)),
        dimension_numbers=("NCHW", "OIHW", "NCHW"))


def conv_stem_reference(x_nchw, params, embed_dim):
    s1, b1 = fold_bn(params["bn1_g"], params["bn1_b"], params["bn1_m"], params["bn1_v"])
    s2, b2 = fold_bn(params["bn2_g"], params["bn2_b"], params["bn2_m"], params["bn2_v"])
    y = _ref_conv(x_nchw, params["conv1_w"], 2, 1)
    y = jnp.maximum(y * s1[None, :, None, None] + b1[None, :, None, None], 0.0)
    y = _ref_conv(y, params["conv2_w"], 2, 1)
    y = jnp.maximum(y * s2[None, :, None, None] + b2[None, :, None, None], 0.0)
    y = _ref_conv(y, params["conv3_w"], 1, 0) + params["conv3_b"][None, :, None, None]
    B, D, Ho, Wo = y.shape
    return jnp.transpose(y.reshape(B, D, Ho * Wo), (0, 2, 1))


# ----------------------------------------------------------------------------
# Deterministic synthetic parameters (shapes from ConvStem.__init__)
# ----------------------------------------------------------------------------
def init_params(key, embed_dim):
    c1, c2 = embed_dim // 8, embed_dim // 4
    ks = jax.random.split(key, 12)

    def nrm(k, shape, fan_in):
        return jax.random.normal(k, shape, jnp.float32) / jnp.sqrt(fan_in)

    return {
        "conv1_w": nrm(ks[0], (c1, 3, 3, 3), 27.0),
        "bn1_g": 1.0 + 0.1 * jax.random.normal(ks[1], (c1,), jnp.float32),
        "bn1_b": 0.1 * jax.random.normal(ks[2], (c1,), jnp.float32),
        "bn1_m": 0.05 * jax.random.normal(ks[3], (c1,), jnp.float32),
        "bn1_v": 0.5 + jax.random.uniform(ks[4], (c1,), jnp.float32),
        "conv2_w": nrm(ks[5], (c2, c1, 3, 3), 9.0 * c1),
        "bn2_g": 1.0 + 0.1 * jax.random.normal(ks[6], (c2,), jnp.float32),
        "bn2_b": 0.1 * jax.random.normal(ks[7], (c2,), jnp.float32),
        "bn2_m": 0.05 * jax.random.normal(ks[8], (c2,), jnp.float32),
        "bn2_v": 0.5 + jax.random.uniform(ks[9], (c2,), jnp.float32),
        "conv3_w": nrm(ks[10], (embed_dim, c2, 1, 1), float(c2)),
        "conv3_b": 0.05 * jax.random.normal(ks[11], (embed_dim,), jnp.float32),
    }


if __name__ == "__main__":
    # Small shapes consistent with the module: in_chans=3 (hard-coded in the stem),
    # spatial 16x16 (divisible by patch_size=4), embed_dim=32 (divisible by 8).
    B, C, H, W = 2, 3, 16, 16
    embed_dim = 32

    key = jax.random.PRNGKey(0)
    kx, kp = jax.random.split(key)
    x = jax.random.normal(kx, (B, C, H, W), jnp.float32)   # NCHW like PyTorch
    params = init_params(kp, embed_dim)

    out = jax.block_until_ready(conv_stem_forward(x, params, embed_dim))
    ref = jax.block_until_ready(conv_stem_reference(x, params, embed_dim))

    assert out.shape == (B, (H // 4) * (W // 4), embed_dim), out.shape
    err = float(jnp.max(jnp.abs(out - ref)))
    scale = float(jnp.max(jnp.abs(ref)))
    # bf16 MXU operands + bf16 carried activation -> ~1e-2-scale numeric budget.
    assert err <= 5e-2 * max(1.0, scale), (err, scale)

    print("KERNEL_OK")
</pallas_src>

<mosaic_0001>
module attributes {stable_mosaic.version = 11 : i64} {
  func.func @_stem_kernel(%arg0: i32, %arg1: i32, %arg2: memref<1x16x108xbf16, #tpu.memory_space<vmem>>, %arg3: memref<108x16xbf16, #tpu.memory_space<vmem>>, %arg4: memref<1x16xf32, #tpu.memory_space<vmem>>, %arg5: memref<4x16x8xbf16, #tpu.memory_space<vmem>>, %arg6: memref<1x8xf32, #tpu.memory_space<vmem>>, %arg7: memref<8x32xbf16, #tpu.memory_space<vmem>>, %arg8: memref<1x32xf32, #tpu.memory_space<vmem>>, %arg9: memref<1x16x32xf32, #tpu.memory_space<vmem>>, %arg10: memref<21x16xbf16, #tpu.memory_space<vmem>>) attributes {dimension_semantics = [#tpu.dimension_semantics<parallel>, #tpu.dimension_semantics<arbitrary>], iteration_bounds = array<i64: 2, 1>, scalar_prefetch = 0 : i64, scratch_operands = 1 : i64, tpu.core_type = #tpu.core_type<tc>, window_params = [{transform_indices = @transform_0, window_bounds = array<i64: 1, 16, 108>}, {pipeline_mode = #tpu.pipeline_mode<synchronous>, transform_indices = @transform_1, window_bounds = array<i64: 108, 16>}, {pipeline_mode = #tpu.pipeline_mode<synchronous>, transform_indices = @transform_2, window_bounds = array<i64: 1, 16>}, {pipeline_mode = #tpu.pipeline_mode<synchronous>, transform_indices = @transform_3, window_bounds = array<i64: 4, 16, 8>}, {pipeline_mode = #tpu.pipeline_mode<synchronous>, transform_indices = @transform_4, window_bounds = array<i64: 1, 8>}, {pipeline_mode = #tpu.pipeline_mode<synchronous>, transform_indices = @transform_5, window_bounds = array<i64: 8, 32>}, {pipeline_mode = #tpu.pipeline_mode<synchronous>, transform_indices = @transform_6, window_bounds = array<i64: 1, 32>}, {transform_indices = @transform_7, window_bounds = array<i64: 1, 16, 32>}]} {
    %c0_i32 = arith.constant 0 : i32
    %0 = arith.cmpi eq, %arg1, %c0_i32 : i32
    %1 = arith.extui %0 : i1 to i32
    %c0_i32_0 = arith.constant 0 : i32
    %2 = arith.cmpi ne, %1, %c0_i32_0 : i32
    scf.if %2 {
      %cst_46 = arith.constant 0.000000e+00 : bf16
      %74 = vector.broadcast %cst_46 : bf16 to vector<21x16xbf16>
      %c0_47 = arith.constant 0 : index
      %c0_48 = arith.constant 0 : index
      %75 = vector.load %arg10[%c0_47, %c0_48] : memref<21x16xbf16, #tpu.memory_space<vmem>>, vector<21x16xbf16>
      tpu.vector_store %arg10[%c0_47, %c0_48], %74 {strides = array<i32>} : memref<21x16xbf16, #tpu.memory_space<vmem>>, vector<21x16xbf16>,
    } else {
    }
    %c0 = arith.constant 0 : index
    %c0_1 = arith.constant 0 : index
    %c0_2 = arith.constant 0 : index
    %3 = vector.load %arg2[%c0, %c0_1, %c0_2] : memref<1x16x108xbf16, #tpu.memory_space<vmem>>, vector<1x16x108xbf16>
    %4 = vector.shape_cast %3 : vector<1x16x108xbf16> to vector<16x108xbf16>
    %c0_3 = arith.constant 0 : index
    %c0_4 = arith.constant 0 : index
    %5 = vector.load %arg3[%c0_3, %c0_4] : memref<108x16xbf16, #tpu.memory_space<vmem>>, vector<108x16xbf16>
    %cst = arith.constant dense<0.000000e+00> : vector<16x16xf32>
    %6 = tpu.matmul %4, %5, %cst {dimension_numbers = #tpu.dot_dimension_numbers<[1], [0], [0], [1], [0, 0, 1, 1], [], []>} : vector<16x108xbf16>, vector<108x16xbf16>, vector<16x16xf32> -> vector<16x16xf32>
    %c0_5 = arith.constant 0 : index
    %c0_6 = arith.constant 0 : index
    %7 = vector.load %arg4[%c0_5, %c0_6] : memref<1x16xf32, #tpu.memory_space<vmem>>, vector<1x16xf32>
    %8 = vector.broadcast %7 : vector<1x16xf32> to vector<16x16xf32>
    %9 = arith.addf %6, %8 : vector<16x16xf32>
    %cst_7 = arith.constant 0.000000e+00 : f32
    %10 = vector.broadcast %cst_7 : f32 to vector<16x16xf32>
    %11 = arith.maximumf %9, %10 : vector<16x16xf32>
    %12 = arith.truncf %11 : vector<16x16xf32> to vector<16x16xbf16>
    %c5 = arith.constant 5 : index
    %c0_8 = arith.constant 0 : index
    %13 = vector.load %arg10[%c5, %c0_8] : memref<21x16xbf16, #tpu.memory_space<vmem>>, vector<16x16xbf16>
    tpu.vector_store %arg10[%c5, %c0_8], %12 {strides = array<i32>} : memref<21x16xbf16, #tpu.memory_space<vmem>>, vector<16x16xbf16>,
    %c1 = arith.constant 1 : index
    %c0_9 = arith.constant 0 : index
    %14 = vector.load %arg10[%c1, %c0_9] : memref<21x16xbf16, #tpu.memory_space<vmem>>, vector<16x16xbf16>
    %c0_10 = arith.constant 0 : index
    %c0_11 = arith.constant 0 : index
    %15 = vector.load %arg10[%c0_10, %c0_11] : memref<21x16xbf16, #tpu.memory_space<vmem>>, vector<16x16xbf16>
    %c4 = arith.constant 4 : index
    %c0_12 = arith.constant 0 : index
    %16 = vector.load %arg10[%c4, %c0_12] : memref<21x16xbf16, #tpu.memory_space<vmem>>, vector<16x16xbf16>
    %17 = tpu.iota {dimensions = array<i32: 0>} : vector<16x1xi32>
    %c4_i32 = arith.constant 4 : i32
    %c0_i32_13 = arith.constant 0 : i32
    %18 = arith.cmpi eq, %c4_i32, %c0_i32_13 : i32
    %c1_i32 = arith.constant 1 : i32
    %19 = arith.select %18, %c1_i32, %c4_i32 : i32
    %20 = vector.broadcast %19 : i32 to vector<16x1xi32>
    %21 = arith.remsi %17, %20 : vector<16x1xi32>
    %c0_i32_14 = arith.constant 0 : i32
    %22 = vector.broadcast %c0_i32_14 : i32 to vector<16x1xi32>
    %23 = arith.cmpi ne, %21, %22 : vector<16x1xi32>
    %c0_i32_15 = arith.constant 0 : i32
    %24 = vector.broadcast %c0_i32_15 : i32 to vector<16x1xi32>
    %25 = arith.cmpi slt, %21, %24 : vector<16x1xi32>
    %c0_i32_16 = arith.constant 0 : i32
    %26 = arith.cmpi slt, %19, %c0_i32_16 : i32
    %27 = vector.broadcast %26 : i1 to vector<16x1xi1>
    %28 = vector.broadcast %27 : vector<16x1xi1> to vector<16x1xi1>
    %29 = arith.xori %25, %28 : vector<16x1xi1>
    %30 = arith.andi %29, %23 : vector<16x1xi1>
    %31 = vector.broadcast %19 : i32 to vector<16x1xi32>
    %32 = arith.addi %21, %31 : vector<16x1xi32>
    %33 = arith.select %30, %32, %21 : vector<16x1xi1>, vector<16x1xi32>
    %c0_i32_17 = arith.constant 0 : i32
    %34 = vector.broadcast %c0_i32_17 : i32 to vector<16x1xi32>
    %35 = arith.cmpi ne, %33, %34 : vector<16x1xi32>
    %cst_18 = arith.constant 0.000000e+00 : bf16
    %36 = vector.broadcast %cst_18 : bf16 to vector<16x16xbf16>
    %37 = vector.shape_cast %35 : vector<16x1xi1> to vector<16x1xi1>
    %38 = vector.broadcast %37 : vector<16x1xi1> to vector<16x16xi1>
    %39 = arith.select %38, %15, %36 : vector<16x16xi1>, vector<16x16xbf16>
    %40 = vector.shape_cast %35 : vector<16x1xi1> to vector<16x1xi1>
    %41 = vector.broadcast %40 : vector<16x1xi1> to vector<16x16xi1>
    %42 = arith.select %41, %16, %36 : vector<16x16xi1>, vector<16x16xbf16>
    %43 = vector.extract_strided_slice %12 {offsets = [12, 0], sizes = [4, 16], strides = [1, 1]} : vector<16x16xbf16> to vector<4x16xbf16>
    %c1_19 = arith.constant 1 : index
    %c0_20 = arith.constant 0 : index
    %44 = vector.load %arg10[%c1_19, %c0_20] : memref<21x16xbf16, #tpu.memory_space<vmem>>, vector<4x16xbf16>
    tpu.vector_store %arg10[%c1_19, %c0_20], %43 {strides = array<i32>} : memref<21x16xbf16, #tpu.memory_space<vmem>>, vector<4x16xbf16>,
    %c0_21 = arith.constant 0 : index
    %c0_22 = arith.constant 0 : index
    %c0_23 = arith.constant 0 : index
    %45 = vector.load %arg5[%c0_21, %c0_22, %c0_23] : memref<4x16x8xbf16, #tpu.memory_space<vmem>>, vector<1x16x8xbf16>
    %46 = vector.shape_cast %45 : vector<1x16x8xbf16> to vector<16x8xbf16>
    %cst_24 = arith.constant dense<0.000000e+00> : vector<16x8xf32>
    %47 = tpu.matmul %39, %46, %cst_24 {dimension_numbers = #tpu.dot_dimension_numbers<[1], [0], [0], [1], [0, 0, 1, 1], [], []>} : vector<16x16xbf16>, vector<16x8xbf16>, vector<16x8xf32> -> vector<16x8xf32>
    %c1_25 = arith.constant 1 : index
    %c0_26 = arith.constant 0 : index
    %c0_27 = arith.constant 0 : index
    %48 = vector.load %arg5[%c1_25, %c0_26, %c0_27] : memref<4x16x8xbf16, #tpu.memory_space<vmem>>, vector<1x16x8xbf16>
    %49 = vector.shape_cast %48 : vector<1x16x8xbf16> to vector<16x8xbf16>
    %cst_28 = arith.constant dense<0.000000e+00> : vector<16x8xf32>
    %50 = tpu.matmul %14, %49, %cst_28 {dimension_numbers = #tpu.dot_dimension_numbers<[1], [0], [0], [1], [0, 0, 1, 1], [], []>} : vector<16x16xbf16>, vector<16x8xbf16>, vector<16x8xf32> -> vector<16x8xf32>
    %51 = arith.addf %47, %50 : vector<16x8xf32>
    %c2 = arith.constant 2 : index
    %c0_29 = arith.constant 0 : index
    %c0_30 = arith.constant 0 : index
    %52 = vector.load %arg5[%c2, %c0_29, %c0_30] : memref<4x16x8xbf16, #tpu.memory_space<vmem>>, vector<1x16x8xbf16>
    %53 = vector.shape_cast %52 : vector<1x16x8xbf16> to vector<16x8xbf16>
    %cst_31 = arith.constant dense<0.000000e+00> : vector<16x8xf32>
    %54 = tpu.matmul %42, %53, %cst_31 {dimension_numbers = #tpu.dot_dimension_numbers<[1], [0], [0], [1], [0, 0, 1, 1], [], []>} : vector<16x16xbf16>, vector<16x8xbf16>, vector<16x8xf32> -> vector<16x8xf32>
    %55 = arith.addf %51, %54 : vector<16x8xf32>
    %c3 = arith.constant 3 : index
    %c0_32 = arith.constant 0 : index
    %c0_33 = arith.constant 0 : index
    %56 = vector.load %arg5[%c3, %c0_32, %c0_33] : memref<4x16x8xbf16, #tpu.memory_space<vmem>>, vector<1x16x8xbf16>
    %57 = vector.shape_cast %56 : vector<1x16x8xbf16> to vector<16x8xbf16>
    %cst_34 = arith.constant dense<0.000000e+00> : vector<16x8xf32>
    %58 = tpu.matmul %12, %57, %cst_34 {dimension_numbers = #tpu.dot_dimension_numbers<[1], [0], [0], [1], [0, 0, 1, 1], [], []>} : vector<16x16xbf16>, vector<16x8xbf16>, vector<16x8xf32> -> vector<16x8xf32>
    %59 = arith.addf %55, %58 : vector<16x8xf32>
    %c0_35 = arith.constant 0 : index
    %c0_36 = arith.constant 0 : index
    %60 = vector.load %arg6[%c0_35, %c0_36] : memref<1x8xf32, #tpu.memory_space<vmem>>, vector<1x8xf32>
    %61 = vector.broadcast %60 : vector<1x8xf32> to vector<16x8xf32>
    %62 = arith.addf %59, %61 : vector<16x8xf32>
    %cst_37 = arith.constant 0.000000e+00 : f32
    %63 = vector.broadcast %cst_37 : f32 to vector<16x8xf32>
    %64 = arith.maximumf %62, %63 : vector<16x8xf32>
    %65 = arith.truncf %64 : vector<16x8xf32> to vector<16x8xbf16>
    %c0_38 = arith.constant 0 : index
    %c0_39 = arith.constant 0 : index
    %66 = vector.load %arg7[%c0_38, %c0_39] : memref<8x32xbf16, #tpu.memory_space<vmem>>, vector<8x32xbf16>
    %cst_40 = arith.constant dense<0.000000e+00> : vector<16x32xf32>
    %67 = tpu.matmul %65, %66, %cst_40 {dimension_numbers = #tpu.dot_dimension_numbers<[1], [0], [0], [1], [0, 0, 1, 1], [], []>} : vector<16x8xbf16>, vector<8x32xbf16>, vector<16x32xf32> -> vector<16x32xf32>
    %c0_41 = arith.constant 0 : index
    %c0_42 = arith.constant 0 : index
    %68 = vector.load %arg8[%c0_41, %c0_42] : memref<1x32xf32, #tpu.memory_space<vmem>>, vector<1x32xf32>
    %69 = vector.broadcast %68 : vector<1x32xf32> to vector<16x32xf32>
    %70 = arith.addf %67, %69 : vector<16x32xf32>
    %c0_43 = arith.constant 0 : index
    %c0_44 = arith.constant 0 : index
    %c0_45 = arith.constant 0 : index
    %71 = vector.load %arg9[%c0_43, %c0_44, %c0_45] : memref<1x16x32xf32, #tpu.memory_space<vmem>>, vector<1x16x32xf32>
    %72 = vector.shape_cast %71 : vector<1x16x32xf32> to vector<16x32xf32>
    %73 = vector.shape_cast %70 : vector<16x32xf32> to vector<1x16x32xf32>
    tpu.vector_store %arg9[%c0_43, %c0_44, %c0_45], %73 {strides = array<i32>} : memref<1x16x32xf32, #tpu.memory_space<vmem>>, vector<1x16x32xf32>,
    return
  }
  func.func @transform_0(%arg0: i32, %arg1: i32) -> (i32, i32, i32) {
    %c0_i32 = arith.constant 0 : i32
    %c0_i32_0 = arith.constant 0 : i32
    return %arg0, %arg1, %c0_i32 : i32, i32, i32
  }
  func.func @transform_1(%arg0: i32, %arg1: i32) -> (i32, i32) {
    %c0_i32 = arith.constant 0 : i32
    %c0_i32_0 = arith.constant 0 : i32
    %c0_i32_1 = arith.constant 0 : i32
    return %c0_i32, %c0_i32_0 : i32, i32
  }
  func.func @transform_2(%arg0: i32, %arg1: i32) -> (i32, i32) {
    %c0_i32 = arith.constant 0 : i32
    %c0_i32_0 = arith.constant 0 : i32
    %c0_i32_1 = arith.constant 0 : i32
    return %c0_i32, %c0_i32_0 : i32, i32
  }
  func.func @transform_3(%arg0: i32, %arg1: i32) -> (i32, i32, i32) {
    %c0_i32 = arith.constant 0 : i32
    %c0_i32_0 = arith.constant 0 : i32
    %c0_i32_1 = arith.constant 0 : i32
    %c0_i32_2 = arith.constant 0 : i32
    return %c0_i32, %c0_i32_0, %c0_i32_1 : i32, i32, i32
  }
  func.func @transform_4(%arg0: i32, %arg1: i32) -> (i32, i32) {
    %c0_i32 = arith.constant 0 : i32
    %c0_i32_0 = arith.constant 0 : i32
    %c0_i32_1 = arith.constant 0 : i32
    return %c0_i32, %c0_i32_0 : i32, i32
  }
  func.func @transform_5(%arg0: i32, %arg1: i32) -> (i32, i32) {
    %c0_i32 = arith.constant 0 : i32
    %c0_i32_0 = arith.constant 0 : i32
    %c0_i32_1 = arith.constant 0 : i32
    return %c0_i32, %c0_i32_0 : i32, i32
  }
  func.func @transform_6(%arg0: i32, %arg1: i32) -> (i32, i32) {
    %c0_i32 = arith.constant 0 : i32
    %c0_i32_0 = arith.constant 0 : i32
    %c0_i32_1 = arith.constant 0 : i32
    return %c0_i32, %c0_i32_0 : i32, i32
  }
  func.func @transform_7(%arg0: i32, %arg1: i32) -> (i32, i32, i32) {
    %c0_i32 = arith.constant 0 : i32
    %c0_i32_0 = arith.constant 0 : i32
    return %arg0, %arg1, %c0_i32 : i32, i32, i32
  }
}

</mosaic_0001>

<llo_original>
// kernel: tpu_custom_call.1
$region0: #{tpu_custom_call.1}
  #allocation0 [shape = 'u32[]', space=smem, size = 0x4, offset = 0x4, fixed_abs, tag = 'smem constant byte address 0x4 - core index']
  #allocation1 [shape = 'u32[72,128]{1,0:T(1,128)}', space=vmem, size = 0x9000, scoped, tag = 'internal scratch']
  #allocation2 [shape = 'bf16[21,16]{1,0:T(8,128)(2,1)}', space=vmem, size = 0x1800, scoped, tag = 'scratch operand']
  %s0 = inlined_call_operand.vmem [shape: bf16[2,16,108], index: 0, kind: input, shape index: {}]
  %s1 = inlined_call_operand.vmem [shape: bf16[108,16], index: 1, kind: input, shape index: {}]
  %s2 = inlined_call_operand.vmem [shape: f32[1,16], index: 2, kind: input, shape index: {}]
  %s3 = inlined_call_operand.vmem [shape: bf16[4,16,8], index: 3, kind: input, shape index: {}]
  %s4 = inlined_call_operand.vmem [shape: f32[1,8], index: 4, kind: input, shape index: {}]
  %s5 = inlined_call_operand.vmem [shape: bf16[8,32], index: 5, kind: input, shape index: {}]
  %s6 = inlined_call_operand.vmem [shape: f32[1,32], index: 6, kind: input, shape index: {}]
  %s7 = inlined_call_operand.hbm [shape: f32[2,16,32], index: 7, kind: output, shape index: {}]
  %s8 = sld [smem:[#allocation0]]
  $region65: #{tpu_custom_call.1} parent=0
    _
  %s10 = ssub.s32 1, %s8
  %s11 = scalar_select 0, %s10, %s8
  $region1: #{tpu_custom_call.1} parent=0
    #allocation3 [shape = 'u8[16384]{0}', space=vmem, size = 0x4000, scoped, tag = 'output window, operand 0']
    #allocation4 [shape = 's32[2]{0}', space=sflag, size = 0x8, scoped, tag = 'scoped memory for tpu_custom_call.1']
    %12 = vsyncpa [#allocation4], 0
    %s13 = scalar_lea.sflag [#allocation4], 1
    %14 = vsyncpa %s13, 0
    loop: start=0, step=1, limit=4
    $region2: #{tpu_custom_call.1} parent=1 // loop_pre_header
      _
    $region3: #{tpu_custom_call.1} parent=1 // loop_header
      %s16 = sphi 0, %s20
      %p17 = scmp.ge.s32.totalorder %s16, 4
      %s23 = sphi 0, %s35
      %s24 = sphi 0, %s31
      %s25 = sphi 0, %s23
      %s26 = sphi 0, %s24
      %s27 = sphi 0, %s25
      %s28 = sphi 0, %s26
      %s40 = sphi 0, %s42
      %s43 = sphi 0, %s40
      %s44 = sphi 0, %s43
      %s60 = sphi 0, %s44
      %s64 = sphi 0, %s64
      %s66 = sphi 0, %s64
      %s67 = sphi 0, %s66
      %s81 = sphi 0, %s67
      %s85 = sphi 0, %s85
      %s87 = sphi 0, %s85
      %s88 = sphi 0, %s87
      %s102 = sphi 0, %s88
      %s106 = sphi 0, %s106
      %s108 = sphi 0, %s106
      %s109 = sphi 0, %s108
      %s123 = sphi 0, %s109
      %s127 = sphi 0, %s127
      %s129 = sphi 0, %s127
      %s130 = sphi 0, %s129
      %s144 = sphi 0, %s130
      %s148 = sphi 0, %s148
      %s150 = sphi 0, %s148
      %s151 = sphi 0, %s150
      %s165 = sphi 0, %s151
      %s169 = sphi 0, %s169
      %s171 = sphi 0, %s169
      %s172 = sphi 0, %s171
      %s186 = sphi 0, %s172
      %s194 = sphi 0, %s196
      %s197 = sphi 0, %s194
      %s198 = sphi 0, %s197
      %s214 = sphi 0, %s198
    $region4: #{tpu_custom_call.1} parent=1 // loop_header_branch
      %19 = sbr.rel (%p17) target = $region8
    $region5: #{tpu_custom_call.1} parent=1 // loop_body
      %s21 = ssub.s32 %s16, 1
      %s22 = ssub.s32 %s16, 2
      %s29 = sadd.s32 1, %s24
      %p30 = scmp.ge.s32.totalorder %s29, 1
      %s31 = scalar_select %p30, 0, %s29
      %s32 = sadd.s32 1, %s23
      %s33 = scalar_select %p30, %s32, %s23
      %p34 = scmp.ge.s32.totalorder %s33, 2
      %s35 = scalar_select %p34, 0, %s33
      %s36 = ssub.s32 %s23, %s35
      %s37 = ssub.s32 %s24, %s31
      %s38 = sor.u32 %s36, %s37
      %p39 = scmp.eq.s32.totalorder %s38, 0
      %s41 = sadd.s32 %s40, 1
      %s42 = scalar_select %p39, %s40, %s41
      %p45 = pneg %p39
      %p46 = scmp.eq.s32.totalorder %s16, 1
      %p47 = por %p45, %p46
      %p48 = scmp.ne.s32.totalorder %s40, %s43
      %p49 = scmp.eq.s32.totalorder %s16, 0
      %p50 = por %p48, %p49
      %p51 = scmp.ne.s32.totalorder %s40, %s43
      %p52 = scmp.eq.s32.totalorder %s21, 1
      %p53 = por %p51, %p52
      %p54 = scmp.ne.s32.totalorder %s43, %s44
      %p55 = scmp.eq.s32.totalorder %s21, 0
      %p56 = por %p54, %p55
      %p57 = scmp.ne.s32.totalorder %s43, %s44
      %p58 = scmp.eq.s32.totalorder %s22, 1
      %p59 = por %p57, %p58
      %p61 = scmp.ne.s32.totalorder %s44, %s60
      %p62 = scmp.eq.s32.totalorder %s22, 0
      %p63 = por %p61, %p62
      %s65 = sadd.s32 %s64, 1
      %p68 = scmp.eq.s32.totalorder %s16, 1
      %p69 = scmp.ne.s32.totalorder %s64, %s66
      %p70 = scmp.eq.s32.totalorder %s16, 0
      %p71 = por %p69, %p70
      %p72 = scmp.ne.s32.totalorder %s64, %s66
      %p73 = scmp.eq.s32.totalorder %s21, 1
      %p74 = por %p72, %p73
      %p75 = scmp.ne.s32.totalorder %s66, %s67
      %p76 = scmp.eq.s32.totalorder %s21, 0
      %p77 = por %p75, %p76
      %p78 = scmp.ne.s32.totalorder %s66, %s67
      %p79 = scmp.eq.s32.totalorder %s22, 1
      %p80 = por %p78, %p79
      %p82 = scmp.ne.s32.totalorder %s67, %s81
      %p83 = scmp.eq.s32.totalorder %s22, 0
      %p84 = por %p82, %p83
      %s86 = sadd.s32 %s85, 1
      %p89 = scmp.eq.s32.totalorder %s16, 1
      %p90 = scmp.ne.s32.totalorder %s85, %s87
      %p91 = scmp.eq.s32.totalorder %s16, 0
      %p92 = por %p90, %p91
      %p93 = scmp.ne.s32.totalorder %s85, %s87
      %p94 = scmp.eq.s32.totalorder %s21, 1
      %p95 = por %p93, %p94
      %p96 = scmp.ne.s32.totalorder %s87, %s88
      %p97 = scmp.eq.s32.totalorder %s21, 0
      %p98 = por %p96, %p97
      %p99 = scmp.ne.s32.totalorder %s87, %s88
      %p100 = scmp.eq.s32.totalorder %s22, 1
      %p101 = por %p99, %p100
      %p103 = scmp.ne.s32.totalorder %s88, %s102
      %p104 = scmp.eq.s32.totalorder %s22, 0
      %p105 = por %p103, %p104
      %s107 = sadd.s32 %s106, 1
      %p110 = scmp.eq.s32.totalorder %s16, 1
      %p111 = scmp.ne.s32.totalorder %s106, %s108
      %p112 = scmp.eq.s32.totalorder %s16, 0
      %p113 = por %p111, %p112
      %p114 = scmp.ne.s32.totalorder %s106, %s108
      %p115 = scmp.eq.s32.totalorder %s21, 1
      %p116 = por %p114, %p115
      %p117 = scmp.ne.s32.totalorder %s108, %s109
      %p118 = scmp.eq.s32.totalorder %s21, 0
      %p119 = por %p117, %p118
      %p120 = scmp.ne.s32.totalorder %s108, %s109
      %p121 = scmp.eq.s32.totalorder %s22, 1
      %p122 = por %p120, %p121
      %p124 = scmp.ne.s32.totalorder %s109, %s123
      %p125 = scmp.eq.s32.totalorder %s22, 0
      %p126 = por %p124, %p125
      %s128 = sadd.s32 %s127, 1
      %p131 = scmp.eq.s32.totalorder %s16, 1
      %p132 = scmp.ne.s32.totalorder %s127, %s129
      %p133 = scmp.eq.s32.totalorder %s16, 0
      %p134 = por %p132, %p133
      %p135 = scmp.ne.s32.totalorder %s127, %s129
      %p136 = scmp.eq.s32.totalorder %s21, 1
      %p137 = por %p135, %p136
      %p138 = scmp.ne.s32.totalorder %s129, %s130
      %p139 = scmp.eq.s32.totalorder %s21, 0
      %p140 = por %p138, %p139
      %p141 = scmp.ne.s32.totalorder %s129, %s130
      %p142 = scmp.eq.s32.totalorder %s22, 1
      %p143 = por %p141, %p142
      %p145 = scmp.ne.s32.totalorder %s130, %s144
      %p146 = scmp.eq.s32.totalorder %s22, 0
      %p147 = por %p145, %p146
      %s149 = sadd.s32 %s148, 1
      %p152 = scmp.eq.s32.totalorder %s16, 1
      %p153 = scmp.ne.s32.totalorder %s148, %s150
      %p154 = scmp.eq.s32.totalorder %s16, 0
      %p155 = por %p153, %p154
      %p156 = scmp.ne.s32.totalorder %s148, %s150
      %p157 = scmp.eq.s32.totalorder %s21, 1
      %p158 = por %p156, %p157
      %p159 = scmp.ne.s32.totalorder %s150, %s151
      %p160 = scmp.eq.s32.totalorder %s21, 0
      %p161 = por %p159, %p160
      %p162 = scmp.ne.s32.totalorder %s150, %s151
      %p163 = scmp.eq.s32.totalorder %s22, 1
      %p164 = por %p162, %p163
      %p166 = scmp.ne.s32.totalorder %s151, %s165
      %p167 = scmp.eq.s32.totalorder %s22, 0
      %p168 = por %p166, %p167
      %s170 = sadd.s32 %s169, 1
      %p173 = scmp.eq.s32.totalorder %s16, 1
      %p174 = scmp.ne.s32.totalorder %s169, %s171
      %p175 = scmp.eq.s32.totalorder %s16, 0
      %p176 = por %p174, %p175
      %p177 = scmp.ne.s32.totalorder %s169, %s171
      %p178 = scmp.eq.s32.totalorder %s21, 1
      %p179 = por %p177, %p178
      %p180 = scmp.ne.s32.totalorder %s171, %s172
      %p181 = scmp.eq.s32.totalorder %s21, 0
      %p182 = por %p180, %p181
      %p183 = scmp.ne.s32.totalorder %s171, %s172
      %p184 = scmp.eq.s32.totalorder %s22, 1
      %p185 = por %p183, %p184
      %p187 = scmp.ne.s32.totalorder %s172, %s186
      %p188 = scmp.eq.s32.totalorder %s22, 0
      %p189 = por %p187, %p188
      %s190 = ssub.s32 %s23, %s35
      %s191 = ssub.s32 %s24, %s31
      %s192 = sor.u32 %s190, %s191
      %p193 = scmp.eq.s32.totalorder %s192, 0
      %s195 = sadd.s32 %s194, 1
      %s196 = scalar_select %p193, %s194, %s195
      %p199 = pneg %p193
      %p200 = scmp.eq.s32.totalorder %s16, 1
      %p201 = por %p199, %p200
      %p202 = scmp.ne.s32.totalorder %s194, %s197
      %p203 = scmp.eq.s32.totalorder %s16, 0
      %p204 = por %p202, %p203
      %p205 = scmp.ne.s32.totalorder %s194, %s197
      %p206 = scmp.eq.s32.totalorder %s21, 1
      %p207 = por %p205, %p206
      %p208 = scmp.ne.s32.totalorder %s197, %s198
      %p209 = scmp.eq.s32.totalorder %s21, 0
      %p210 = por %p208, %p209
      %p211 = scmp.ne.s32.totalorder %s197, %s198
      %p212 = scmp.eq.s32.totalorder %s22, 1
      %p213 = por %p211, %p212
      %p215 = scmp.ne.s32.totalorder %s198, %s214
      %p216 = scmp.eq.s32.totalorder %s22, 0
      %p217 = por %p215, %p216
      %p218 = scmp.le.s32.totalorder 1, %s16
      %p219 = scmp.lt.s32.totalorder %s16, 3
      %p220 = pnand %p218, %p219
      %p221 = pneg %p220
      // Predicated region
      $region9: #{tpu_custom_call.1} parent=5 // pred_check
        _
      $region10: #{tpu_custom_call.1} parent=5 // pred_check_branch
        %223 = sbr.rel (%p220) target = $region12
      $region11: #{tpu_custom_call.1} parent=5 // pred_region
        %s224 = ssub.s32 %s16, 1
        // Predicated region
        $region13: #{tpu_custom_call.1} parent=11 // pred_check
          %p225 = pneg %p77
        $region14: #{tpu_custom_call.1} parent=11 // pred_check_branch
          %227 = sbr.rel (%p225) target = $region16
        $region15: #{tpu_custom_call.1} parent=11 // pred_region
          _
        $region16: #{tpu_custom_call.1} parent=11 // pred_fallthru
          _
        // Predicated region
        $region17: #{tpu_custom_call.1} parent=11 // pred_check
          %p228 = pneg %p98
        $region18: #{tpu_custom_call.1} parent=11 // pred_check_branch
          %230 = sbr.rel (%p228) target = $region20
        $region19: #{tpu_custom_call.1} parent=11 // pred_region
          _
        $region20: #{tpu_custom_call.1} parent=11 // pred_fallthru
          _
        // Predicated region
        $region21: #{tpu_custom_call.1} parent=11 // pred_check
          %p231 = pneg %p119
        $region22: #{tpu_custom_call.1} parent=11 // pred_check_branch
          %233 = sbr.rel (%p231) target = $region24
        $region23: #{tpu_custom_call.1} parent=11 // pred_region
          _
        $region24: #{tpu_custom_call.1} parent=11 // pred_fallthru
          _
        // Predicated region
        $region25: #{tpu_custom_call.1} parent=11 // pred_check
          %p234 = pneg %p140
        $region26: #{tpu_custom_call.1} parent=11 // pred_check_branch
          %236 = sbr.rel (%p234) target = $region28
        $region27: #{tpu_custom_call.1} parent=11 // pred_region
          _
        $region28: #{tpu_custom_call.1} parent=11 // pred_fallthru
          _
        // Predicated region
        $region29: #{tpu_custom_call.1} parent=11 // pred_check
          %p237 = pneg %p161
        $region30: #{tpu_custom_call.1} parent=11 // pred_check_branch
          %239 = sbr.rel (%p237) target = $region32
        $region31: #{tpu_custom_call.1} parent=11 // pred_region
          _
        $region32: #{tpu_custom_call.1} parent=11 // pred_fallthru
          _
        // Predicated region
        $region33: #{tpu_custom_call.1} parent=11 // pred_check
          %p240 = pneg %p182
        $region34: #{tpu_custom_call.1} parent=11 // pred_check_branch
          %242 = sbr.rel (%p240) target = $region36
        $region35: #{tpu_custom_call.1} parent=11 // pred_region
          _
        $region36: #{tpu_custom_call.1} parent=11 // pred_fallthru
          _
      $region12: #{tpu_custom_call.1} parent=5 // pred_fallthru
        _
      %p243 = scmp.lt.s32.totalorder %s16, 2
      // Predicated region
      $region37: #{tpu_custom_call.1} parent=5 // pred_check
        %p244 = pneg %p243
      $region38: #{tpu_custom_call.1} parent=5 // pred_check_branch
        %246 = sbr.rel (%p244) target = $region40
      $region39: #{tpu_custom_call.1} parent=5 // pred_region
        // Predicated region
        $region41: #{tpu_custom_call.1} parent=39 // pred_check
          %p247 = pneg %p50
        $region42: #{tpu_custom_call.1} parent=39 // pred_check_branch
          %249 = sbr.rel (%p247) target = $region44
        $region43: #{tpu_custom_call.1} parent=39 // pred_region
          %s250 = smul.u32 2, %s24
          %p251 = scmp.lt.s32.totalorder %s23, 1
          %s252 = scalar_select %p251, %s23, 1
          %p253 = scmp.lt.s32.totalorder %s250, 1
          %s254 = scalar_select %p253, %s250, 1
          %s255 = smul.addr %s252, 2
          %s256 = sadd.s32 %s254, %s255
          %s257 = smul.addr %s256, 4
          %s258 = scalar_lea.vmem %s0, %s257
          %s259 = smul.u32 2, %s24
        $region44: #{tpu_custom_call.1} parent=39 // pred_fallthru
          _
      $region40: #{tpu_custom_call.1} parent=5 // pred_fallthru
        _
      %p260 = scmp.le.s32.totalorder 1, %s16
      %p261 = scmp.lt.s32.totalorder %s16, 3
      %p262 = pnand %p260, %p261
      %p263 = pneg %p262
      // Predicated region
      $region45: #{tpu_custom_call.1} parent=5 // pred_check
        _
      $region46: #{tpu_custom_call.1} parent=5 // pred_check_branch
        %265 = sbr.rel (%p262) target = $region48
      $region47: #{tpu_custom_call.1} parent=5 // pred_region
        %s266 = ssub.s32 %s16, 1
        %s267 = smul.u32 2, %s26
        %p268 = scmp.lt.s32.totalorder %s25, 1
        %s269 = scalar_select %p268, %s25, 1
        %p270 = scmp.lt.s32.totalorder %s267, 1
        %s271 = scalar_select %p270, %s267, 1
        %s272 = smul.addr %s269, 2
        %s273 = sadd.s32 %s271, %s272
        %s274 = smul.addr %s273, 4
        %s275 = scalar_lea.vmem %s0, %s274
        %p276 = pneg %p56
        %p277 = pneg %p53
        %p278 = pneg %p77
        %p279 = pneg %p74
        %p280 = pneg %p98
        %p281 = pneg %p95
        %p282 = pneg %p119
        %p283 = pneg %p116
        %p284 = pneg %p140
        %p285 = pneg %p137
        %p286 = pneg %p161
        %p287 = pneg %p158
        %p288 = pneg %p182
        %p289 = pneg %p179
        %p290 = pneg %p210
        %p291 = pneg %p207
        %s292 = sand.u32 %s197, 1
        %s293 = scalar_lea.sflag [#allocation4], %s292
        %s294 = sand.u32 %s197, 1
        %s295 = smul.addr %s294, 16
        %s296 = scalar_lea.vmem [#allocation3], %s295
        %s297 = smul.u32 2, %s26
        %p298 = scmp.lt.s32.totalorder %s25, 1
        %s299 = scalar_select %p298, %s25, 1
        %p300 = scmp.lt.s32.totalorder %s297, 1
        %s301 = scalar_select %p300, %s297, 1
        %s302 = smul.addr %s299, 2
        %s303 = sadd.s32 %s301, %s302
        %s304 = smul.addr %s303, 4
        %s305 = scalar_lea.vmem %s0, %s304
        %s306 = smul.u32 2, %s26
        %s307 = smul.u32 2, %s26
        %p311 = scmp.eq.s32.totalorder %s26, 0
        // Predicated region
        $region49: #{tpu_custom_call.1} parent=47 // pred_check
          %p312 = pneg %p311
        $region50: #{tpu_custom_call.1} parent=47 // pred_check_branch
          %314 = sbr.rel (%p312) target = $region52
        $region51: #{tpu_custom_call.1} parent=47 // pred_region
          %vm315 = vcmask 125952
          %316 = vst.msk [vmem:[#allocation2] sm:$0xf] %vm315, 0
          %317 = vst.msk [vmem:[#allocation2 + $0x4] sm:$0xf] %vm315, 0
          %vm318 = vcmask 124928
          %vm319 = vsmask.f32 2304
          %vm320 = vmand %vm318, %vm319
          %v321 = vld [vmem:[#allocation2 + $0x8] sm:$0x7]
          %v322 = vsel %vm320, 0, %v321
          %323 = vst [vmem:[#allocation2 + $0x8] sm:$0x7] %v322
        $region52: #{tpu_custom_call.1} parent=47 // pred_fallthru
          _
        %v324 = vld [vmem:[%s305] sm:$0xf]
        %v325 = vld [vmem:[%s305 + $0x4] sm:$0xf]
        %v326 = vld [vmem:[%s1] sm:$0xf]
        %v327 = vld [vmem:[%s1 + $0x4] sm:$0xf]
        %v328 = vld [vmem:[%s1 + $0x8] sm:$0xf]
        %v329 = vld [vmem:[%s1 + $0xc] sm:$0xf]
        %v330 = vld [vmem:[%s1 + $0x10] sm:$0xf]
        %v331 = vld [vmem:[%s1 + $0x14] sm:$0xf]
        %v332 = vld [vmem:[%s1 + $0x18] sm:$0xf]
        %v333 = vld [vmem:[%s1 + $0x1c] sm:$0xf]
        %v334 = vld [vmem:[%s1 + $0x20] sm:$0xf]
        %v335 = vld [vmem:[%s1 + $0x24] sm:$0xf]
        %v336 = vld [vmem:[%s1 + $0x28] sm:$0xf]
        %v337 = vld [vmem:[%s1 + $0x2c] sm:$0xf]
        %v338 = vld [vmem:[%s1 + $0x30] sm:$0xf]
        %v339 = vld [vmem:[%s1 + $0x34] sm:$0x3]
        %v340 = vld [vmem:[%s2] sm:$0x1]
        %v342 = vperm.slane %v340, 0
        %v346 = vunpack.c.l.b16 %v324
        %v347 = vunpack.c.l.b16 %v325
        %v348 = vpack.c.b16 %v347, %v346
        %v363 = vunpack.c.l.b16 %v326
        %v364 = vunpack.c.l.b16 %v327
        %v365 = vunpack.c.l.b16 %v328
        %v366 = vunpack.c.l.b16 %v329
        %v367 = vunpack.c.l.b16 %v330
        %v368 = vunpack.c.l.b16 %v331
        %v369 = vunpack.c.l.b16 %v332
        %v370 = vunpack.c.l.b16 %v333
        %v371 = vunpack.c.l.b16 %v334
        %v372 = vunpack.c.l.b16 %v335
        %v373 = vunpack.c.l.b16 %v336
        %v374 = vunpack.c.l.b16 %v337
        %v375 = vunpack.c.l.b16 %v338
        %v376 = vunpack.c.l.b16 %v339
        %v377 = vpack.c.b16 %v364, %v363
        %v378 = vpack.c.b16 %v366, %v365
        %v379 = vpack.c.b16 %v368, %v367
        %v380 = vpack.c.b16 %v370, %v369
        %v381 = vpack.c.b16 %v372, %v371
        %v382 = vpack.c.b16 %v374, %v373
        %v383 = vpack.c.b16 %v376, %v375
        %vm390 = vcmask 883712
        %v392 = vsel %vm390, %v348, 0
        %vm394 = vcmask 1045504
        %v396 = vsel %vm394, %v383, 0
        %398 = vmatpush.bf16.msra.mxu0 0
        %399 = vmatpush.bf16.msra.mxu0 %v396
        %400 = vmatpush.bf16.msra.mxu0 %v382
        %401 = vmatpush.bf16.msra.mxu0 %v381
        %402 = vmatpush.bf16.msra.mxu0 %v380
        %403 = vmatpush.bf16.msra.mxu0 %v379
        %404 = vmatpush.bf16.msra.mxu0 %v378
        %405 = vmatpush.bf16.msra.mxu0 %v377
        %406 = vmatmul.bf16.gmra.mxu0 %v392
        %v407 = vpop.f32.mrf.mxu0
        %v408 = vadd.f32 %v342, %v407
        %v409 = vpop.f32.mrf.mxu0
        %v410 = vadd.f32 %v342, %v409
        %411 = vdwg.mxu0
        %v412 = vmax.f32 %v408, 0.0
        %v413 = vmax.f32 %v410, 0.0
        %v414 = vpack.c.bf16 %v412, %v412
        %v415 = vpack.c.bf16 %v413, %v413
        %vm416 = vsmask.f32 2304
        %vm417 = vsmask.f32 6416
        %vm418 = vmor %vm416, %vm417
        %v420 = vshrl.u32 %v414, 16
        %v422 = vrot.slane %v420, 5
        %v423 = vshll.u32 %v414, 16
        %v425 = vrot.slane %v423, 6
        %v426 = vor.u32 %v422, %v425
        %v427 = vrot.slane %v426, 4
        %v429 = vshrl.u32 %v415, 16
        %v431 = vrot.slane %v429, 5
        %v432 = vshll.u32 %v415, 16
        %v434 = vrot.slane %v432, 6
        %v435 = vor.u32 %v431, %v434
        %v436 = vsel %vm418, %v427, %v435
        %v437 = vrot.slane %v435, 4
        %vm441 = vcmask 125954
        %vm442 = vsmask.f32 7946
        %vm443 = vmand %vm441, %vm442
        %v444 = vld [vmem:[#allocation2] sm:$0xc]
        %v445 = vsel %vm443, %v426, %v444
        %446 = vst [vmem:[#allocation2] sm:$0xc] %v445
        %vm447 = vcmask 125952
        %448 = vst.msk [vmem:[#allocation2 + $0x4] sm:$0xf] %vm447, %v436
        %vm449 = vcmask 124928
        %vm450 = vmand %vm449, %vm416
        %v451 = vld [vmem:[#allocation2 + $0x8] sm:$0x7]
        %v452 = vsel %vm450, %v437, %v451
        %453 = vst [vmem:[#allocation2 + $0x8] sm:$0x7] %v452
        %v454 = vld [vmem:[#allocation2] sm:$0xf]
        %v455 = vld [vmem:[#allocation2 + $0x4] sm:$0xf]
        %v456 = vld [vmem:[#allocation2 + $0x8] sm:$0x1]
        %v457 = vld [vmem:[#allocation2] sm:$0xc]
        %v458 = vld [vmem:[#allocation2 + $0x8] sm:$0x3]
        %v459 = vlaneseq
        %v460 = vshrl.u32 %v459, 7
        %v461 = vadd.s32 %v460, 8
        %vm462 = vcmp.lt.s32.totalorder %v460, 0
        %v463 = vsub.s32 0, %v460
        %v464 = vsel %vm462, %v463, %v460
        %v465 = vshrl.u32 %v464, 2
        %v466 = vand.u32 %v464, 3
        %v467 = vsub.s32 0, %v466
        %v468 = vsel %vm462, %v467, %v466
        %vm469 = vcmp.lt.s32.totalorder %v461, 0
        %v470 = vsub.s32 0, %v461
        %v471 = vsel %vm469, %v470, %v461
        %v472 = vshrl.u32 %v471, 2
        %v473 = vand.u32 %v471, 3
        %v474 = vsub.s32 0, %v473
        %v475 = vsel %vm469, %v474, %v473
        %vm476 = vcmp.ne.s32.totalorder %v468, 0
        %vm477 = vcmp.ne.s32.totalorder %v475, 0
        %vm478 = vcmp.lt.s32.totalorder %v468, 0
        %vm479 = vcmp.lt.s32.totalorder %v475, 0
        %vm480 = vmand %vm478, %vm476
        %vm481 = vmand %vm479, %vm477
        %v482 = vadd.s32 %v468, 4
        %v483 = vadd.s32 %v475, 4
        %v484 = vsel %vm480, %v482, %v468
        %v485 = vsel %vm481, %v483, %v475
        %vm486 = vcmp.ne.s32.totalorder %v484, 0
        %vm487 = vcmp.ne.s32.totalorder %v485, 0
        %v488 = vsel %vm486, 1, 0
        %v489 = vsel %vm487, 1, 0
        %vm490 = vcmp.eq.s32.totalorder %v488, 1
        %vm491 = vcmp.eq.s32.totalorder %v489, 1
        %vm492 = vmpackc.low %vm490, %vm490
        %vm493 = vmpackc.low %vm491, %vm491
        %v494 = vsel %vm492, %v454, 0
        %v495 = vsel %vm493, %v455, 0
        %v496 = vsel %vm492, 65537, 0
        %v497 = vsel %vm493, 65537, 0
        %vm498 = vcmask 1041408
        %vm499 = vcmask 1045508
        %vm500 = vmor %vm498, %vm499
        %v501 = vrot.slane %v496, 6
        %v502 = vrot.slane %v501, 4
        %v503 = vrot.slane %v497, 6
        %v504 = vsel %vm500, %v502, %v503
        %v505 = vrot.slane %v503, 4
        %v506 = vunpack.c.l.b16 %v501
        %v507 = vunpack.c.h.b16 %v501
        %v508 = vunpack.c.l.b16 0
        %v509 = vunpack.c.h.b16 0
        %vm510 = vcmp.ne.s32.totalorder %v506, %v508
        %vm511 = vcmp.ne.s32.totalorder %v507, %v509
        %vm512 = vmpackc.low %vm511, %vm510
        %v513 = vunpack.c.l.b16 %v504
        %v514 = vunpack.c.h.b16 %v504
        %v515 = vunpack.c.l.b16 0
        %v516 = vunpack.c.h.b16 0
        %vm517 = vcmp.ne.s32.totalorder %v513, %v515
        %vm518 = vcmp.ne.s32.totalorder %v514, %v516
        %vm519 = vmpackc.low %vm518, %vm517
        %v520 = vunpack.c.l.b16 %v505
        %v521 = vunpack.c.h.b16 %v505
        %v522 = vunpack.c.l.b16 0
        %v523 = vunpack.c.h.b16 0
        %vm524 = vcmp.ne.s32.totalorder %v520, %v522
        %vm525 = vcmp.ne.s32.totalorder %v521, %v523
        %vm526 = vmpackc.low %vm525, %vm524
        %v527 = vsel %vm512, %v457, 0
        %v528 = vsel %vm519, %v455, 0
        %v529 = vsel %vm526, %v458, 0
        %vm530 = vsmask.f32 2306
        %vm531 = vmand %vm449, %vm530
        %v532 = vld [vmem:[#allocation2] sm:$0x7]
        %v533 = vsel %vm531, %v437, %v532
        %534 = vst [vmem:[#allocation2] sm:$0x7] %v533
        %v535 = vld [vmem:[%s3] sm:$0xf]
        %v536 = vld [vmem:[%s3 + $0x4] sm:$0xf]
        %s537 = scalar_lea.vmem %s3, 8
        %v538 = vld [vmem:[%s537] sm:$0xf]
        %v539 = vld [vmem:[%s537 + $0x4] sm:$0xf]
        %v543 = vunpack.c.l.b16 %v454
        %v544 = vunpack.c.l.b16 %v455
        %v545 = vunpack.c.l.b16 %v456
        %v546 = vpack.c.b16 %v544, %v543
        %v547 = vpack.c.b16 %v545, %v545
        %vm548 = vsmask.f32 7424
        %v550 = vshrl.u32 %v546, 16
        %v552 = vshll.u32 %v546, 16
        %v554 = vrot.slane %v552, 1
        %v555 = vor.u32 %v550, %v554
        %v557 = vshll.u32 %v547, 16
        %v559 = vrot.slane %v557, 1
        %v560 = vsel %vm548, %v555, %v559
        %v563 = vunpack.c.l.b16 %v538
        %v564 = vunpack.c.l.b16 %v539
        %v565 = vpack.c.b16 %v564, %v563
        %vm567 = vcmask 130048
        %v569 = vsel %vm567, %v560, 0
        %571 = vmatpush.bf16.msra.mxu0 0
        %572 = vmatpush.bf16.msra.mxu0 0
        %573 = vmatpush.bf16.msra.mxu0 0
        %574 = vmatpush.bf16.msra.mxu0 0
        %575 = vmatpush.bf16.msra.mxu0 0
        %576 = vmatpush.bf16.msra.mxu0 0
        %577 = vmatpush.bf16.msra.mxu0 0
        %578 = vmatpush.bf16.msra.mxu0 %v565
        %579 = vmatmul.bf16.gmra.mxu0 %v569
        %v580 = vpop.f32.mrf.mxu0
        %v581 = vadd.f32 0.0, %v580
        %v582 = vpop.f32.mrf.mxu0
        %v583 = vadd.f32 0.0, %v582
        %584 = vdwg.mxu0
        %v587 = vunpack.c.l.b16 %v494
        %v588 = vunpack.c.l.b16 %v495
        %v589 = vpack.c.b16 %v588, %v587
        %v592 = vunpack.c.l.b16 %v535
        %v593 = vunpack.c.l.b16 %v536
        %v594 = vpack.c.b16 %v593, %v592
        %v597 = vsel %vm567, %v589, 0
        %599 = vmatpush.bf16.msra.mxu0 0
        %600 = vmatpush.bf16.msra.mxu0 0
        %601 = vmatpush.bf16.msra.mxu0 0
        %602 = vmatpush.bf16.msra.mxu0 0
        %603 = vmatpush.bf16.msra.mxu0 0
        %604 = vmatpush.bf16.msra.mxu0 0
        %605 = vmatpush.bf16.msra.mxu0 0
        %606 = vmatpush.bf16.msra.mxu0 %v594
        %607 = vmatmul.bf16.gmra.mxu0 %v597
        %v608 = vpop.f32.mrf.mxu0
        %v609 = vadd.f32 %v581, %v608
        %v610 = vpop.f32.mrf.mxu0
        %v611 = vadd.f32 %v583, %v610
        %612 = vdwg.mxu0
        %s613 = scalar_lea.vmem %s3, 16
        %v614 = vld [vmem:[%s613] sm:$0xf]
        %v615 = vld [vmem:[%s613 + $0x4] sm:$0xf]
        %v619 = vunpack.c.l.b16 %v527
        %v620 = vunpack.c.l.b16 %v528
        %v621 = vunpack.c.l.b16 %v529
        %v622 = vpack.c.b16 %v620, %v619
        %v623 = vpack.c.b16 %v621, %v621
        %vm624 = vcmask 1045504
        %v625 = vrot.slane %v622, 2
        %v626 = vrot.slane %v623, 2
        %v627 = vsel %vm624, %v625, %v626
        %v630 = vunpack.c.l.b16 %v614
        %v631 = vunpack.c.l.b16 %v615
        %v632 = vpack.c.b16 %v631, %v630
        %v635 = vsel %vm567, %v627, 0
        %637 = vmatpush.bf16.msra.mxu0 0
        %638 = vmatpush.bf16.msra.mxu0 0
        %639 = vmatpush.bf16.msra.mxu0 0
        %640 = vmatpush.bf16.msra.mxu0 0
        %641 = vmatpush.bf16.msra.mxu0 0
        %642 = vmatpush.bf16.msra.mxu0 0
        %643 = vmatpush.bf16.msra.mxu0 0
        %644 = vmatpush.bf16.msra.mxu0 %v632
        %645 = vmatmul.bf16.gmra.mxu0 %v635
        %v646 = vpop.f32.mrf.mxu0
        %v647 = vadd.f32 0.0, %v646
        %v648 = vpop.f32.mrf.mxu0
        %v649 = vadd.f32 0.0, %v648
        %650 = vdwg.mxu0
        %v651 = vadd.f32 %v609, %v647
        %v652 = vadd.f32 %v611, %v649
        %s653 = scalar_lea.vmem %s3, 24
        %v654 = vld [vmem:[%s653] sm:$0xf]
        %v655 = vld [vmem:[%s653 + $0x4] sm:$0xf]
        %v658 = vunpack.c.l.b16 %v414
        %v659 = vunpack.c.l.b16 %v415
        %v660 = vpack.c.b16 %v659, %v658
        %v663 = vunpack.c.l.b16 %v654
        %v664 = vunpack.c.l.b16 %v655
        %v665 = vpack.c.b16 %v664, %v663
        %v668 = vsel %vm567, %v660, 0
        %670 = vmatpush.bf16.msra.mxu0 0
        %671 = vmatpush.bf16.msra.mxu0 0
        %672 = vmatpush.bf16.msra.mxu0 0
        %673 = vmatpush.bf16.msra.mxu0 0
        %674 = vmatpush.bf16.msra.mxu0 0
        %675 = vmatpush.bf16.msra.mxu0 0
        %676 = vmatpush.bf16.msra.mxu0 0
        %677 = vmatpush.bf16.msra.mxu0 %v665
        %678 = vmatmul.bf16.gmra.mxu0 %v668
        %v679 = vpop.f32.mrf.mxu0
        %v680 = vadd.f32 0.0, %v679
        %v681 = vpop.f32.mrf.mxu0
        %v682 = vadd.f32 0.0, %v681
        %683 = vdwg.mxu0
        %v684 = vadd.f32 %v651, %v680
        %v685 = vadd.f32 %v652, %v682
        %v686 = vld [vmem:[%s4] sm:$0x1]
        %v688 = vperm.slane %v686, 0
        %v690 = vadd.f32 %v684, %v688
        %v691 = vadd.f32 %v685, %v688
        %v692 = vmax.f32 %v690, 0.0
        %v693 = vmax.f32 %v691, 0.0
        %v694 = vpack.c.bf16 %v693, %v692
        %v695 = vld [vmem:[%s5] sm:$0xf]
        %v696 = vld [vmem:[%s6] sm:$0x1]
        %v698 = vperm.slane %v696, 0
        %vm700 = vcmask 64512
        %v702 = vsel %vm700, %v694, 0
        %vm704 = vcmask 1043456
        %v706 = vsel %vm704, %v695, 0
        %708 = vmatpush.bf16.msra.mxu0 0
        %709 = vmatpush.bf16.msra.mxu0 0
        %710 = vmatpush.bf16.msra.mxu0 0
        %711 = vmatpush.bf16.msra.mxu0 0
        %712 = vmatpush.bf16.msra.mxu0 0
        %713 = vmatpush.bf16.msra.mxu0 0
        %714 = vmatpush.bf16.msra.mxu0 0
        %715 = vmatpush.bf16.msra.mxu0 %v706
        %716 = vmatmul.bf16.gmra.mxu0 %v702
        %v717 = vpop.f32.mrf.mxu0
        %v718 = vadd.f32 %v698, %v717
        %v719 = vpop.f32.mrf.mxu0
        %v720 = vadd.f32 %v698, %v719
        %721 = vdwg.mxu0
        %vm722 = vcmask 261120
        %723 = vst.msk [vmem:[%s296] sm:$0xff] %vm722, %v718
        %724 = vst.msk [vmem:[%s296 + $0x8] sm:$0xff] %vm722, %v720
        %s725 = sand.u32 %s197, 1
        %s726 = scalar_lea.sflag [#allocation4], %s725
        %s727 = sand.u32 %s197, 1
        %s728 = smul.addr %s727, 16
        %s729 = scalar_lea.vmem [#allocation3], %s728
        // Predicated region
        $region53: #{tpu_custom_call.1} parent=47 // pred_check
          %p730 = pneg %p207
        $region54: #{tpu_custom_call.1} parent=47 // pred_check_branch
          %732 = sbr.rel (%p730) target = $region56
        $region55: #{tpu_custom_call.1} parent=47 // pred_region
          %s733 = smul.u32 2, %s26
          %735 = vsyncadd %s726, 0
          %s736 = smul.addr %s25, 2
          %s737 = sadd.s32 %s733, %s736
          %s738 = smul.addr %s737, 8
          %s739 = scalar_lea.hbm %s7, %s738
          %s740 = sshll.u32 %s729, 4
          %s741 = int_to_ptr.vmem [resolvable:$true] %s740
          %s742 = sshll.u32 %s739, 4
          %s743 = int_to_ptr.hbm [resolvable:$true] %s742
          %748 = dma.vmem_to_hbm [thread:$0]  %s741, 256, %s743, %s726, 128, 128, 8
        $region56: #{tpu_custom_call.1} parent=47 // pred_fallthru
          _
      $region48: #{tpu_custom_call.1} parent=5 // pred_fallthru
        _
      %p749 = scmp.le.s32.totalorder 2, %s16
      // Predicated region
      $region57: #{tpu_custom_call.1} parent=5 // pred_check
        %p750 = pneg %p749
      $region58: #{tpu_custom_call.1} parent=5 // pred_check_branch
        %752 = sbr.rel (%p750) target = $region60
      $region59: #{tpu_custom_call.1} parent=5 // pred_region
        %s753 = ssub.s32 %s16, 2
        // Predicated region
        $region61: #{tpu_custom_call.1} parent=59 // pred_check
          %p754 = pneg %p213
        $region62: #{tpu_custom_call.1} parent=59 // pred_check_branch
          %756 = sbr.rel (%p754) target = $region64
        $region63: #{tpu_custom_call.1} parent=59 // pred_region
          %s757 = sand.u32 %s198, 1
          %s758 = scalar_lea.sflag [#allocation4], %s757
          %s759 = sand.u32 %s198, 1
          %s760 = smul.addr %s759, 16
          %s761 = scalar_lea.vmem [#allocation3], %s760
          %763 = dma.done %s758, 256
        $region64: #{tpu_custom_call.1} parent=59 // pred_fallthru
          _
      $region60: #{tpu_custom_call.1} parent=5 // pred_fallthru
        _
    $region6: #{tpu_custom_call.1} parent=1 // loop_footer
      %s20 = sadd.s32 1, %s16
    $region7: #{tpu_custom_call.1} parent=1 // loop_footer_branch
      %15 = sbr.rel target = $region3
    $region8: #{tpu_custom_call.1} parent=1 // loop_exit
      _
    %764 = vsyncpa [#allocation4], 1
    %s765 = scalar_lea.sflag [#allocation4], 1
    %766 = vsyncpa %s765, 1

</llo_original>
